<compile_context>
chip_gen: v7x
topology: tpu7x:2x2x1
jax: 0.10.0
libtpu: 0.0.40
codegen_flags: <defaults>
</compile_context>

<pallas_src>
import functools
import numpy as np
import jax
import jax.numpy as jnp
from jax.experimental import pallas as pl
from jax.experimental.pallas import tpu as pltpu


def _round_up(x, m):
    return ((x + m - 1) // m) * m


def _floor_mult(x, m):
    return max(m, (x // m) * m)


# --------------------------------------------------------------------------
# Kernels
# --------------------------------------------------------------------------
def _phm_kernel_full_k(x_ref, w_ref, b_ref, o_ref, *, cast_dtype, precision):
    # x_ref: (tm, K) activations   w_ref: (K, tn) W.T   b_ref: (1, tn) f32
    x = x_ref[...].astype(cast_dtype)            # in-kernel cast (VPU, hidden)
    acc = jnp.dot(x, w_ref[...], precision=precision,
                  preferred_element_type=jnp.float32)
    o_ref[...] = (acc + b_ref[...]).astype(o_ref.dtype)   # single lane-dense store


def _phm_kernel_k_tiled(x_ref, w_ref, b_ref, o_ref, acc_ref, *, cast_dtype, precision):
    # Reduction over the K grid axis (last, "arbitrary"); acc_ref is f32 VMEM.
    k = pl.program_id(2)

    @pl.when(k == 0)
    def _():
        acc_ref[...] = jnp.zeros_like(acc_ref)

    x = x_ref[...].astype(cast_dtype)
    acc_ref[...] += jnp.dot(x, w_ref[...], precision=precision,
                            preferred_element_type=jnp.float32)

    @pl.when(k == pl.num_programs(2) - 1)
    def _():
        o_ref[...] = (acc_ref[...] + b_ref[...]).astype(o_ref.dtype)


# --------------------------------------------------------------------------
# Tile planning (host-side, runs once)
# --------------------------------------------------------------------------
def _plan_tiles(M, K, N_pad, cbx, cbw, ob, budget, tm_req, tn_req, sub):
    cap = budget - (4 << 20)                      # headroom for compiler scratch

    def est_full(tm_, tn_):                       # double-buffered, full-K tiles
        return 2 * (tm_ * K * cbx + K * tn_ * cbw + tn_ * 4 + tm_ * tn_ * ob)

    def est_kt(tm_, tn_, tk_):                    # K-tiled + f32 accumulator
        return (2 * (tm_ * tk_ * cbx + tk_ * tn_ * cbw + tn_ * 4 + tm_ * tn_ * ob)
                + tm_ * tn_ * 4)

    tm0 = min(_round_up(M, sub), _round_up(tm_req, sub))
    tn0 = min(_floor_mult(tn_req, 128), N_pad)

    # 1) Full-width N first: weight block index becomes constant -> W DMA'd once.
    if est_full(tm0, N_pad) <= cap:
        return dict(mode="full_k", tm=tm0, tn=N_pad, tk=K)

    # 2) Full-K with greedy tile back-off.
    tm_, tn_ = tm0, tn0
    while est_full(tm_, tn_) > cap:
        if tn_ > 128 and (K * tn_ * cbw) >= (tm_ * K * cbx):
            tn_ = _floor_mult(tn_ // 2, 128)
        elif tm_ > max(sub, 128):
            tm_ = _floor_mult(tm_ // 2, sub)
        elif tn_ > 128:
            tn_ = _floor_mult(tn_ // 2, 128)
        else:
            break
    if est_full(tm_, tn_) <= cap:
        return dict(mode="full_k", tm=tm_, tn=tn_, tk=K)

    # 3) K-tiled fallback for very large in_features (keeps the kernel
    #    MXU-bound at any K instead of spilling / failing on v7x's 64 MiB).
    tm_ = min(tm0, _round_up(512, sub))
    tn_ = min(tn0, 512)
    tk_ = min(2048, _round_up(K, 128))
    while est_kt(tm_, tn_, tk_) > cap:
        if tk_ > 128:
            tk_ = _floor_mult(tk_ // 2, 128)
        elif tn_ > 128:
            tn_ = _floor_mult(tn_ // 2, 128)
        elif tm_ > sub:
            tm_ = _floor_mult(tm_ // 2, sub)
        else:
            break
    # Prefer a tk that divides K to avoid zero-padding x along K.
    for cand in range(tk_, 127, -128):
        if K % cand == 0:
            tk_ = cand
            break
    return dict(mode="k_tiled", tm=tm_, tn=tn_, tk=tk_)


# --------------------------------------------------------------------------
# Wrapper
# --------------------------------------------------------------------------
def phm_linear(x, a, s, bias=None, *, tm=None, tn=None,
               compute_dtype=jnp.bfloat16, out_dtype=None, precision=None,
               folded_wt=None):
    """y = F.linear(x, W, bias) with W = sum_i kron(a[i], s[i])."""
    n, O, I = s.shape
    assert a.shape == (n, n, n)
    K = n * I                                    # in_features
    N = n * O                                    # out_features
    assert x.shape[-1] == K

    compute_dtype = jnp.dtype(compute_dtype)
    out_dtype = jnp.dtype(out_dtype if out_dtype is not None else x.dtype)
    x_dtype = jnp.dtype(x.dtype)

    # ---- per-generation VMEM budget --------------------------------------
    try:
        vmem_phys = int(getattr(pltpu.get_tpu_info(), "vmem_capacity_bytes", 64 << 20))
    except Exception:
        vmem_phys = 64 << 20                     # conservative (v7x per-TC)
    budget = int(vmem_phys * 0.75)               # leave compiler headroom

    if tm is None:
        tm = 1024 if budget >= (80 << 20) else 512     # bigger tiles on v5e/v6e
    if tn is None:
        tn = 2048 if budget >= (80 << 20) else 1024

    # ---- fold PHM structure into W.T, directly in final layout & dtype ----
    # kron(a[i], s[i])[u*O+p, v*I+q] = a[i,u,v]*s[i,p,q]  ->  Wt[v*I+q, u*O+p]
    if folded_wt is None:
        Wt = jnp.einsum("nuv,npq->vqup", a.astype(jnp.float32),
                        s.astype(jnp.float32)).reshape(K, N).astype(compute_dtype)
    else:
        Wt = folded_wt.astype(compute_dtype)     # cached fold for inference
    if bias is None:
        b2 = jnp.zeros((1, N), jnp.float32)
    else:
        b2 = bias.astype(jnp.float32).reshape(1, N)

    lead = x.shape[:-1]
    M = int(np.prod(lead)) if lead else 1
    x2 = x.reshape(M, K)

    # ---- lane-dense output: pad out_features to a multiple of 128 ---------
    N_pad = _round_up(N, 128)

    # ---- tile planning -----------------------------------------------------
    cbw = compute_dtype.itemsize
    cbx_plan = max(x_dtype.itemsize, cbw)        # conservative (pre-cast decided later)
    ob = out_dtype.itemsize
    min_item = min(x_dtype.itemsize, cbw, ob)
    sub = max(8, 32 // min_item)                 # sublane packing: 8 f32, 16 bf16

    plan = _plan_tiles(M, K, N_pad, cbx_plan, cbw, ob, budget, tm, tn, sub)
    mode, tm_eff, tn_eff, tk_eff = plan["mode"], plan["tm"], plan["tn"], plan["tk"]

    gM = pl.cdiv(M, tm_eff)
    gN = pl.cdiv(N_pad, tn_eff)

    # ---- K padding (only when K-tiling engaged and tk does not divide K) --
    K_pad = K
    if mode == "k_tiled":
        K_pad = _round_up(K, tk_eff)
        if K_pad != K:
            Wt = jnp.pad(Wt, ((0, K_pad - K), (0, 0)))   # zero K-rows: exact
            x2 = jnp.pad(x2, ((0, 0), (0, K_pad - K)))
        gK = K_pad // tk_eff

    if N_pad != N:
        Wt = jnp.pad(Wt, ((0, 0), (0, N_pad - N)))
        b2 = jnp.pad(b2, ((0, 0), (0, N_pad - N)))

    # ---- grid-axis order: keep the operand with the larger rescan stationary
    w_stationary = True
    if mode == "full_k":
        traffic_x_stat = M * K + gM * N_pad * K          # i outer, j inner
        traffic_w_stat = N_pad * K + gN * M * K          # j outer, i inner
        w_stationary = traffic_w_stat <= traffic_x_stat
        x_revisits = gN if w_stationary else 1
    else:
        x_revisits = gN                                   # x re-streamed per N slab

    # Pre-cast x only when it is re-streamed enough to pay for the extra pass.
    precast = (x2.dtype != compute_dtype
               and compute_dtype.itemsize < jnp.dtype(x2.dtype).itemsize
               and x_revisits >= 4)
    if precast:
        x2 = x2.astype(compute_dtype)

    # ---- specs / kernel selection ------------------------------------------
    if mode == "full_k":
        kernel = functools.partial(_phm_kernel_full_k,
                                   cast_dtype=compute_dtype, precision=precision)
        if w_stationary:
            grid = (gN, gM)
            x_spec = pl.BlockSpec((tm_eff, K_pad), lambda j, i: (i, 0))
            w_spec = pl.BlockSpec((K_pad, tn_eff), lambda j, i: (0, j))
            b_spec = pl.BlockSpec((1, tn_eff), lambda j, i: (0, j))
            o_spec = pl.BlockSpec((tm_eff, tn_eff), lambda j, i: (i, j))
        else:
            grid = (gM, gN)
            x_spec = pl.BlockSpec((tm_eff, K_pad), lambda i, j: (i, 0))
            w_spec = pl.BlockSpec((K_pad, tn_eff), lambda i, j: (0, j))
            b_spec = pl.BlockSpec((1, tn_eff), lambda i, j: (0, j))
            o_spec = pl.BlockSpec((tm_eff, tn_eff), lambda i, j: (i, j))
        scratch = ()
        dims = ("parallel", "parallel")
    else:
        kernel = functools.partial(_phm_kernel_k_tiled,
                                   cast_dtype=compute_dtype, precision=precision)
        grid = (gM, gN, gK)
        x_spec = pl.BlockSpec((tm_eff, tk_eff), lambda i, j, k: (i, k))
        w_spec = pl.BlockSpec((tk_eff, tn_eff), lambda i, j, k: (k, j))
        b_spec = pl.BlockSpec((1, tn_eff), lambda i, j, k: (0, j))
        o_spec = pl.BlockSpec((tm_eff, tn_eff), lambda i, j, k: (i, j))
        scratch = (pltpu.VMEM((tm_eff, tn_eff), jnp.float32),)
        dims = ("parallel", "parallel", "arbitrary")

    # ---- VMEM limit for the chosen configuration ---------------------------
    cbx = jnp.dtype(x2.dtype).itemsize
    if mode == "full_k":
        est = 2 * (tm_eff * K_pad * cbx + K_pad * tn_eff * cbw
                   + tn_eff * 4 + tm_eff * tn_eff * ob)
    else:
        est = (2 * (tm_eff * tk_eff * cbx + tk_eff * tn_eff * cbw
                    + tn_eff * 4 + tm_eff * tn_eff * ob)
               + tm_eff * tn_eff * 4)
    vmem_limit = int(min(budget, max(est + (4 << 20), 32 << 20)))

    y = pl.pallas_call(
        kernel,
        out_shape=jax.ShapeDtypeStruct((M, N_pad), out_dtype),
        grid=grid,
        in_specs=[x_spec, w_spec, b_spec],
        out_specs=o_spec,
        scratch_shapes=scratch,
        compiler_params=pltpu.CompilerParams(
            dimension_semantics=dims,
            vmem_limit_bytes=vmem_limit,
        ),
    )(x2, Wt, b2)

    if N_pad != N:
        y = y[:, :N]
    return y.reshape(*lead, N)


# --------------------------------------------------------------------------
# Parameter init (deterministic stand-in for the module's __init__; n == 4)
# --------------------------------------------------------------------------
def init_phm_linear_params(key, n, in_features, out_features):
    assert n == 4 and in_features % n == 0 and out_features % n == 0
    # Fixed quaternion structure matrices (the 'a' parameter of the module).
    mat1 = np.eye(4, dtype=np.float32)
    mat2 = np.array([[0, -1, 0, 0], [1, 0, 0, 0], [0, 0, 0, -1], [0, 0, 1, 0]], np.float32)
    mat3 = np.array([[0, 0, -1, 0], [0, 0, 0, 1], [1, 0, 0, 0], [0, -1, 0, 0]], np.float32)
    mat4 = np.array([[0, 0, 0, -1], [0, 0, -1, 0], [0, 1, 0, 0], [1, 0, 0, 0]], np.float32)
    a = jnp.asarray(np.stack([mat1, mat2, mat3, mat4], axis=0))      # (4, 4, 4)

    O = out_features // n
    I = in_features // n
    ks, kb = jax.random.split(key)
    # TODO(synk): exact chi-distributed quaternion_init (numpy RandomState / scipy.chi)
    # not reproduced; shapes and 'he' scale (1/sqrt(2*fan_in)) match.
    scale = 1.0 / np.sqrt(2.0 * O)
    s = scale * jax.random.normal(ks, (n, O, I), jnp.float32)        # (4, out//4, in//4)
    bound = 1.0 / np.sqrt(in_features)                               # fan_in of dense weight
    bias = jax.random.uniform(kb, (out_features,), jnp.float32, -bound, bound)
    return a, s, bias


if __name__ == "__main__":
    key = jax.random.PRNGKey(0)
    k_x, k_p = jax.random.split(key)

    n, in_features, out_features = 4, 32, 64
    a, s, bias = init_phm_linear_params(k_p, n, in_features, out_features)

    # Small example input: (batch=2, seq=8, in_features=32)
    x = jax.random.normal(k_x, (2, 8, in_features), jnp.float32)

    # Pure-JAX reference: W = sum_i kron(a[i], s[i]); y = x @ W.T + bias
    W_ref = sum(jnp.kron(a[i], s[i]) for i in range(n))
    y_ref = (x.reshape(-1, in_features) @ W_ref.T + bias).reshape(2, 8, out_features)

    # Exact path (f32 compute) -- tight tolerance.
    y_f32 = jax.block_until_ready(phm_linear(x, a, s, bias, compute_dtype=jnp.float32))
    assert y_f32.shape == (2, 8, out_features)
    np.testing.assert_allclose(np.asarray(y_f32), np.asarray(y_ref), rtol=1e-5, atol=1e-5)

    # Fast path (bf16 MXU inputs, f32 accumulation) -- loose tolerance.
    y_bf16 = jax.block_until_ready(phm_linear(x, a, s, bias, compute_dtype=jnp.bfloat16))
    np.testing.assert_allclose(np.asarray(y_bf16), np.asarray(y_ref), rtol=2e-2, atol=2e-2)

    print("KERNEL_OK")
</pallas_src>

<mosaic_0001>
module attributes {stable_mosaic.version = 11 : i64} {
  func.func @_phm_kernel_full_k(%arg0: i32, %arg1: i32, %arg2: memref<16x32xf32, #tpu.memory_space<vmem>>, %arg3: memref<32x128xf32, #tpu.memory_space<vmem>>, %arg4: memref<1x128xf32, #tpu.memory_space<vmem>>, %arg5: memref<16x128xf32, #tpu.memory_space<vmem>>) attributes {dimension_semantics = [#tpu.dimension_semantics<parallel>, #tpu.dimension_semantics<parallel>], iteration_bounds = array<i64: 1, 1>, scalar_prefetch = 0 : i64, scratch_operands = 0 : i64, tpu.core_type = #tpu.core_type<tc>, window_params = [{transform_indices = @transform_0, window_bounds = array<i64: 16, 32>}, {transform_indices = @transform_1, window_bounds = array<i64: 32, 128>}, {transform_indices = @transform_2, window_bounds = array<i64: 1, 128>}, {transform_indices = @transform_3, window_bounds = array<i64: 16, 128>}]} {
    %c0 = arith.constant 0 : index
    %c0_0 = arith.constant 0 : index
    %0 = vector.load %arg2[%c0, %c0_0] : memref<16x32xf32, #tpu.memory_space<vmem>>, vector<16x32xf32>
    %c0_1 = arith.constant 0 : index
    %c0_2 = arith.constant 0 : index
    %1 = vector.load %arg3[%c0_1, %c0_2] : memref<32x128xf32, #tpu.memory_space<vmem>>, vector<32x128xf32>
    %cst = arith.constant dense<0.000000e+00> : vector<16x128xf32>
    %2 = tpu.matmul %0, %1, %cst {dimension_numbers = #tpu.dot_dimension_numbers<[1], [0], [0], [1], [0, 0, 1, 1], [], []>} : vector<16x32xf32>, vector<32x128xf32>, vector<16x128xf32> -> vector<16x128xf32>
    %c0_3 = arith.constant 0 : index
    %c0_4 = arith.constant 0 : index
    %3 = vector.load %arg4[%c0_3, %c0_4] : memref<1x128xf32, #tpu.memory_space<vmem>>, vector<1x128xf32>
    %4 = vector.broadcast %3 : vector<1x128xf32> to vector<16x128xf32>
    %5 = arith.addf %2, %4 : vector<16x128xf32>
    %c0_5 = arith.constant 0 : index
    %c0_6 = arith.constant 0 : index
    %6 = vector.load %arg5[%c0_5, %c0_6] : memref<16x128xf32, #tpu.memory_space<vmem>>, vector<16x128xf32>
    tpu.vector_store %arg5[%c0_5, %c0_6], %5 {strides = array<i32>} : memref<16x128xf32, #tpu.memory_space<vmem>>, vector<16x128xf32>,
    return
  }
  func.func @transform_0(%arg0: i32, %arg1: i32) -> (i32, i32) {
    %c0_i32 = arith.constant 0 : i32
    %c0_i32_0 = arith.constant 0 : i32
    return %arg1, %c0_i32 : i32, i32
  }
  func.func @transform_1(%arg0: i32, %arg1: i32) -> (i32, i32) {
    %c0_i32 = arith.constant 0 : i32
    %c0_i32_0 = arith.constant 0 : i32
    return %c0_i32, %arg0 : i32, i32
  }
  func.func @transform_2(%arg0: i32, %arg1: i32) -> (i32, i32) {
    %c0_i32 = arith.constant 0 : i32
    %c0_i32_0 = arith.constant 0 : i32
    return %c0_i32, %arg0 : i32, i32
  }
  func.func @transform_3(%arg0: i32, %arg1: i32) -> (i32, i32) {
    %c0_i32 = arith.constant 0 : i32
    return %arg1, %arg0 : i32, i32
  }
}

</mosaic_0001>

<llo_original>
// kernel: tpu_custom_call.1
$region0: #{tpu_custom_call.1}
  #allocation0 [shape = 'u32[]', space=smem, size = 0x4, offset = 0x4, fixed_abs, tag = 'smem constant byte address 0x4 - core index']
  #allocation1 [shape = 'u32[144,128]{1,0:T(1,128)}', space=vmem, size = 0x12000, scoped, tag = 'internal scratch']
  %s0 = inlined_call_operand.hbm [shape: f32[16,32], index: 0, kind: input, shape index: {}]
  %s1 = inlined_call_operand.hbm [shape: f32[32,128], index: 1, kind: input, shape index: {}]
  %s2 = inlined_call_operand.vmem [shape: f32[1,128], index: 2, kind: input, shape index: {}]
  %s3 = inlined_call_operand.hbm [shape: f32[16,128], index: 3, kind: output, shape index: {}]
  %s4 = sld [smem:[#allocation0]]
  $region30: #{tpu_custom_call.1} parent=0
    _
  %s6 = ssub.s32 1, %s4
  %s7 = scalar_select 0, %s6, %s4
  $region1: #{tpu_custom_call.1} parent=0
    #allocation2 [shape = 'u8[8192]{0}', space=vmem, size = 0x2000, scoped, tag = 'input window, operand 0, single buffered']
    #allocation3 [shape = 's32[1]{0}', space=sflag, size = 0x4, scoped, tag = 'scoped memory for tpu_custom_call.1']
    #allocation4 [shape = 's32[1]{0}', space=sflag, size = 0x4, scoped, tag = 'scoped memory for tpu_custom_call.1']
    #allocation5 [shape = 'u8[16384]{0}', space=vmem, size = 0x4000, scoped, tag = 'input window, operand 1, single buffered']
    #allocation6 [shape = 's32[1]{0}', space=sflag, size = 0x4, scoped, tag = 'scoped memory for tpu_custom_call.1']
    #allocation7 [shape = 'u8[8192]{0}', space=vmem, size = 0x2000, scoped, tag = 'output window, operand 0, single buffered']
    %8 = vsyncpa [#allocation3], 0
    %9 = vsyncpa [#allocation6], 0
    %10 = vsyncpa [#allocation4], 0
    // Predicated region
    $region2: #{tpu_custom_call.1} parent=1 // pred_check
      _
    $region3: #{tpu_custom_call.1} parent=1 // pred_check_branch
      %12 = sbr.rel (0) target = $region5
    $region4: #{tpu_custom_call.1} parent=1 // pred_region
      %s14 = ssub.s32 256, 256
      %15 = vsyncadd [#allocation3], %s14
      %s16 = sshll.u32 [#allocation2], 4
      %s17 = int_to_ptr.vmem [resolvable:$true] %s16
      %22 = dma.hbm_to_vmem [thread:$0]  %s0, 256, %s17, [#allocation3], 128, 128, 8
    $region5: #{tpu_custom_call.1} parent=1 // pred_fallthru
      _
    // Predicated region
    $region6: #{tpu_custom_call.1} parent=1 // pred_check
      _
    $region7: #{tpu_custom_call.1} parent=1 // pred_check_branch
      %24 = sbr.rel (0) target = $region9
    $region8: #{tpu_custom_call.1} parent=1 // pred_region
      %s26 = ssub.s32 512, 512
      %27 = vsyncadd [#allocation6], %s26
      %s28 = sshll.u32 [#allocation5], 4
      %s29 = int_to_ptr.vmem [resolvable:$true] %s28
      %34 = dma.hbm_to_vmem [thread:$0]  %s1, 512, %s29, [#allocation6], 128, 128, 8
    $region9: #{tpu_custom_call.1} parent=1 // pred_fallthru
      _
    // Predicated region
    $region10: #{tpu_custom_call.1} parent=1 // pred_check
      _
    $region11: #{tpu_custom_call.1} parent=1 // pred_check_branch
      %36 = sbr.rel (0) target = $region13
    $region12: #{tpu_custom_call.1} parent=1 // pred_region
      _
    $region13: #{tpu_custom_call.1} parent=1 // pred_fallthru
      _
    // Predicated region
    $region14: #{tpu_custom_call.1} parent=1 // pred_check
      _
    $region15: #{tpu_custom_call.1} parent=1 // pred_check_branch
      %38 = sbr.rel (0) target = $region17
    $region16: #{tpu_custom_call.1} parent=1 // pred_region
      %39 = dma.done [#allocation3], 256
    $region17: #{tpu_custom_call.1} parent=1 // pred_fallthru
      _
    // Predicated region
    $region18: #{tpu_custom_call.1} parent=1 // pred_check
      _
    $region19: #{tpu_custom_call.1} parent=1 // pred_check_branch
      %41 = sbr.rel (0) target = $region21
    $region20: #{tpu_custom_call.1} parent=1 // pred_region
      %42 = dma.done [#allocation6], 512
    $region21: #{tpu_custom_call.1} parent=1 // pred_fallthru
      _
    %v43 = vld [vmem:[#allocation2] sm:$0xff]
    %v44 = vld [vmem:[#allocation2 + $0x8] sm:$0xff]
    %v45 = vld [vmem:[#allocation5] sm:$0xff]
    %v46 = vld [vmem:[#allocation5 + $0x8] sm:$0xff]
    %v47 = vld [vmem:[#allocation5 + $0x10] sm:$0xff]
    %v48 = vld [vmem:[#allocation5 + $0x18] sm:$0xff]
    %v49 = vld [vmem:[%s2] sm:$0x1]
    %v51 = vlaneseq
    %v52 = vshrl.u32 %v51, 7
    %v53 = vsub.s32 0, %v52
    %v54 = vrot.slane %v49, %v53
    %vm56 = vcmask 261120
    %v58 = vsel %vm56, %v43, 0
    %v61 = vsel %vm56, %v44, 0
    %63 = vmatprep.subr.mxu0 0.0
    %64 = vmatpush1.msra.mxu0 %v45
    %65 = vmatprep.subr.mxu0 0.0
    %66 = vmatpush1.msra.mxu0 %v46
    %67 = vmatprep.subr.mxu0 0.0
    %68 = vmatpush1.msra.mxu0 %v47
    %69 = vmatprep.subr.mxu0 0.0
    %70 = vmatpush1.msra.mxu0 %v48
    %71 = vmatprep.subr.mxu0 0.0
    %72 = vmatpush1.msra.mxu0 0.0
    %73 = vmatprep.subr.mxu0 0.0
    %74 = vmatpush1.msra.mxu0 0.0
    %75 = vmatprep.subr.mxu0 0.0
    %76 = vmatpush1.msra.mxu0 0.0
    %77 = vmatprep.subr.mxu0 0.0
    %78 = vmatpush1.msra.mxu0 0.0
    %79 = vmatprep.subr.mxu0 0.0
    %80 = vmatpush1.msra.mxu0 0.0
    %81 = vmatprep.subr.mxu0 0.0
    %82 = vmatpush1.msra.mxu0 0.0
    %83 = vmatprep.subr.mxu0 0.0
    %84 = vmatpush1.msra.mxu0 0.0
    %85 = vmatprep.subr.mxu0 0.0
    %86 = vmatpush1.msra.mxu0 0.0
    %87 = vmatprep.subr.mxu0 0.0
    %88 = vmatpush1.msra.mxu0 0.0
    %89 = vmatprep.subr.mxu0 0.0
    %90 = vmatpush1.msra.mxu0 0.0
    %91 = vmatprep.subr.mxu0 0.0
    %92 = vmatpush1.msra.mxu0 0.0
    %93 = vmatprep.subr.mxu0 0.0
    %94 = vmatpush1.msra.mxu0 0.0
    %95 = vmatprep.subr.mxu0 0.0
    %96 = vmatpush1.msra.mxu0 0.0
    %97 = vmatprep.subr.mxu0 0.0
    %98 = vmatpush1.msra.mxu0 0.0
    %99 = vmatprep.subr.mxu0 0.0
    %100 = vmatpush1.msra.mxu0 0.0
    %101 = vmatprep.subr.mxu0 0.0
    %102 = vmatpush1.msra.mxu0 0.0
    %103 = vmatprep.subr.mxu0 0.0
    %104 = vmatpush1.msra.mxu0 0.0
    %105 = vmatprep.subr.mxu0 0.0
    %106 = vmatpush1.msra.mxu0 0.0
    %107 = vmatprep.subr.mxu0 0.0
    %108 = vmatpush1.msra.mxu0 0.0
    %109 = vmatprep.subr.mxu0 0.0
    %110 = vmatpush1.msra.mxu0 0.0
    %111 = vmatprep.subr.mxu0 0.0
    %112 = vmatpush1.msra.mxu0 0.0
    %113 = vmatprep.subr.mxu0 0.0
    %114 = vmatpush1.msra.mxu0 0.0
    %115 = vmatprep.subr.mxu0 0.0
    %116 = vmatpush1.msra.mxu0 0.0
    %117 = vmatprep.subr.mxu0 0.0
    %118 = vmatpush1.msra.mxu0 0.0
    %119 = vmatprep.subr.mxu0 0.0
    %120 = vmatpush1.msra.mxu0 0.0
    %121 = vmatprep.subr.mxu0 0.0
    %122 = vmatpush1.msra.mxu0 0.0
    %123 = vmatprep.subr.mxu0 0.0
    %124 = vmatpush1.msra.mxu0 0.0
    %125 = vmatprep.subr.mxu0 0.0
    %126 = vmatpush1.msra.mxu0 0.0
    %127 = vmatprep.mubr.f32.mxu0 0.0
    %128 = vmatmul.mubr.f32.gmra.mrb[0].mxu0 %v58
    %v129 = vpop.f32.mrb[0].mxu0
    %v130 = vadd.f32 %v54, %v129
    %v131 = vpop.f32.mrb[0].mxu0
    %132 = vmatprep.mubr.f32.mxu0 0.0
    %133 = vmatmul.mubr.f32.gmra.mrb[0].mxu0 %v61
    %v134 = vpop.f32.mrb[0].mxu0
    %v135 = vadd.f32 %v54, %v134
    %v136 = vpop.f32.mrb[0].mxu0
    %137 = vdwg.mxu0
    %138 = vst [vmem:[#allocation7] sm:$0xff] %v130
    %139 = vst [vmem:[#allocation7 + $0x8] sm:$0xff] %v135
    // Predicated region
    $region22: #{tpu_custom_call.1} parent=1 // pred_check
      _
    $region23: #{tpu_custom_call.1} parent=1 // pred_check_branch
      %141 = sbr.rel (0) target = $region25
    $region24: #{tpu_custom_call.1} parent=1 // pred_region
      %s143 = ssub.s32 256, 256
      %144 = vsyncadd [#allocation4], %s143
      %s145 = sshll.u32 [#allocation7], 4
      %s146 = int_to_ptr.vmem [resolvable:$true] %s145
      %151 = dma.vmem_to_hbm [thread:$0]  %s146, 256, %s3, [#allocation4], 128, 128, 8
    $region25: #{tpu_custom_call.1} parent=1 // pred_fallthru
      _
    // Predicated region
    $region26: #{tpu_custom_call.1} parent=1 // pred_check
      _
    $region27: #{tpu_custom_call.1} parent=1 // pred_check_branch
      %153 = sbr.rel (0) target = $region29
    $region28: #{tpu_custom_call.1} parent=1 // pred_region
      %154 = dma.done [#allocation4], 256
    $region29: #{tpu_custom_call.1} parent=1 // pred_fallthru
      _
    %155 = vsyncpa [#allocation3], 1
    %156 = vsyncpa [#allocation6], 1
    %157 = vsyncpa [#allocation4], 1

</llo_original>
